<compile_context>
chip_gen: v7x
topology: tpu7x:2x2x1
jax: 0.10.0
libtpu: 0.0.40
codegen_flags: <defaults>
</compile_context>

<pallas_src>
import functools

import jax
import jax.numpy as jnp
from jax.experimental import pallas as pl
from jax.experimental.pallas import tpu as pltpu


def _round_down(a, b):
    return (a // b) * b


def _distance_head_kernel(xp_ref, w_ref, b1_ref, gw_ref, sc_ref, o_ref, *,
                          groups, group_size, approx_gelu):
    """One packed row-tile of DistanceHead.

    xp_ref : (TMp, groups*group_size) packed rows (`groups` logical rows per packed row)
    w_ref  : (L, L) bf16 block-diagonal kron(I_P, dense.weight)  [out, in] per group
    b1_ref : (H, 1) f32 dense.bias (identical for every lane group)
    gw_ref : (H, 1) f32 layer_norm.weight * out_proj.weight
    sc_ref : (2,)  f32 SMEM scalars [sum(gamma*w2), sum(beta*w2) + out_proj.bias]
    o_ref  : (groups, TMp) f32 scores, one sublane row per packed lane group
    """
    xp = xp_ref[...]
    # x[x == -inf] = 0  (mask before anything else; bf16 preserves -inf so order is safe)
    xp = jnp.where(xp == -jnp.inf, jnp.zeros_like(xp), xp)
    xb = xp.astype(jnp.bfloat16)

    # Dense layer, channels-first & packed: h[j, m] = sum_i W_bd[j, i] * x_packed[m, i].
    # K = 32*P lanes (128 for H=32) -> full-K bf16 MXU pass, f32 accumulation.
    h = jax.lax.dot_general(
        w_ref[...], xb,
        dimension_numbers=(((1,), (1,)), ((), ())),
        preferred_element_type=jnp.float32)                     # (L, TMp) f32

    b1 = b1_ref[...]                  # (H, 1)
    gw = gw_ref[...]                  # (H, 1) = gamma * w2
    c1 = sc_ref[0]                    # sum(gamma * w2)
    c2 = sc_ref[1]                    # sum(beta * w2) + b2
    inv_h = 1.0 / group_size

    # Static loop over the <=4 packed lane groups; slices are vreg-aligned (32 sublanes).
    for g in range(groups):
        hg = h[g * group_size:(g + 1) * group_size, :] + b1     # (H, TMp)
        hg = jax.nn.gelu(hg, approximate=approx_gelu)
        # Single-pass LN stats fused with the affine + out_proj:
        #   score = rstd * (sum(h*gamma*w2) - mean*sum(gamma*w2)) + sum(beta*w2) + b2
        s1 = jnp.sum(hg, axis=0, keepdims=True)                 # (1, TMp)
        s2 = jnp.sum(hg * hg, axis=0, keepdims=True)
        s3 = jnp.sum(hg * gw, axis=0, keepdims=True)
        mean = s1 * inv_h
        var = s2 * inv_h - mean * mean
        rstd = jax.lax.rsqrt(var + 1e-5)                        # nn.LayerNorm default eps
        row = rstd * (s3 - mean * c1) + c2                      # (1, TMp)
        o_ref[pl.ds(g, 1), :] = row.astype(o_ref.dtype)


def _pick_tile(np_rows, lanes, in_itemsize, tile_rows_hint, pack):
    """Packed-row tile size, grid size and a chip-appropriate VMEM limit."""
    try:
        phys_vmem = pltpu.get_tpu_info().vmem_capacity_bytes
    except Exception:
        phys_vmem = 64 * 1024 * 1024            # v7x-conservative fallback
    vmem_limit = min((phys_vmem * 3) // 4, 96 * 1024 * 1024)

    if tile_rows_hint is not None:
        tile_p = max(1, int(tile_rows_hint) // pack)
    else:
        # Per packed row: double-buffered input tile + ~4 live f32 (L, TM) temps.
        per_row = 2 * lanes * in_itemsize + 4 * lanes * 4
        tile_p = (vmem_limit // 3) // per_row
        tile_p = min(tile_p, 16384)
    if tile_p < np_rows:
        tile_p = max(128, _round_down(tile_p, 128))
    if tile_p >= np_rows:
        return np_rows, 1, vmem_limit           # single full-extent tile
    return tile_p, pl.cdiv(np_rows, tile_p), vmem_limit


@functools.partial(jax.jit, static_argnames=("tile_rows", "approx_gelu"))
def distance_head_forward(x, w1, b1, gamma, beta, w2, b2, *,
                          tile_rows=None, approx_gelu=True):
    """DistanceHead forward. Parameters use PyTorch layouts:
       w1: (H, H) dense.weight (out, in); b1: (H,); gamma/beta: (H,);
       w2: (1, H) out_proj.weight; b2: (1,).
    x may be f32 or bf16 (bf16 halves kernel HBM read); the matmul always runs with
    bf16 operands + f32 accumulation. approx_gelu=False matches torch F.gelu (erf)."""
    B, S, S2, H = x.shape
    assert S == S2, "expected a square (bsz, seq, seq, heads) input"
    N = B * S * S

    # Pack P logical rows per packed row (P*H lanes): lane-dense tile + K=128 matmul.
    pack = 4 if N % 4 == 0 else (2 if N % 2 == 0 else 1)
    lanes = pack * H
    np_rows = N // pack
    xp = x.reshape(np_rows, lanes)              # free contiguous reshape: no pad, no copy

    tile_p, grid, vmem_limit = _pick_tile(np_rows, lanes, x.dtype.itemsize,
                                          tile_rows, pack)

    # Tiny parameter prep (fused by XLA).
    f32 = jnp.float32
    w_bd = jnp.kron(jnp.eye(pack, dtype=f32), w1.astype(f32)).astype(jnp.bfloat16)
    b1_c = b1.astype(f32).reshape(H, 1)
    w2_v = w2.reshape(-1).astype(f32)                           # (H,)
    gw_c = (gamma.astype(f32) * w2_v).reshape(H, 1)             # LN scale folded into out_proj
    c1 = jnp.sum(gw_c)
    c2 = jnp.sum(beta.astype(f32) * w2_v) + b2.astype(f32).reshape(())
    scalars = jnp.stack([c1, c2])                               # (2,) SMEM scalars

    kernel = functools.partial(_distance_head_kernel, groups=pack, group_size=H,
                               approx_gelu=approx_gelu)

    scores = pl.pallas_call(
        kernel,
        out_shape=jax.ShapeDtypeStruct((pack, np_rows), jnp.float32),
        grid_spec=pltpu.PrefetchScalarGridSpec(
            num_scalar_prefetch=0,
            grid=(grid,),
            in_specs=[
                pl.BlockSpec((tile_p, lanes), lambda i: (i, 0)),      # packed x row tile
                pl.BlockSpec((lanes, lanes), lambda i: (0, 0)),       # block-diag dense.weight
                pl.BlockSpec((H, 1), lambda i: (0, 0)),               # dense.bias
                pl.BlockSpec((H, 1), lambda i: (0, 0)),               # gamma * w2
                pl.BlockSpec(memory_space=pltpu.MemorySpace.SMEM),    # [c1, c2] scalars
            ],
            out_specs=pl.BlockSpec((pack, tile_p), lambda i: (0, i)),  # lane-dense scores
        ),
        compiler_params=pltpu.CompilerParams(
            dimension_semantics=("parallel",),      # grid sharded over v7x's 2 TCs
            vmem_limit_bytes=int(vmem_limit)),
    )(xp, w_bd, b1_c, gw_c, scalars)

    # Unscramble the (P, N/P) packed layout and symmetrize in plain XLA: the score map
    # is tiny vs. the input, so a second pallas_call would only add step overhead.
    t = scores.T.reshape(B, S, S)
    return (t + jnp.swapaxes(t, -1, -2)) * 0.5


def _reference_forward(x, w1, b1, gamma, beta, w2, b2, approx_gelu):
    # Pure-JAX f32 reference mirroring the PyTorch module (torch-layout params).
    x = x.astype(jnp.float32)
    x = jnp.where(x == -jnp.inf, 0.0, x)
    h = x @ w1.astype(jnp.float32).T + b1.astype(jnp.float32)
    h = jax.nn.gelu(h, approximate=approx_gelu)
    mean = jnp.mean(h, axis=-1, keepdims=True)
    var = jnp.mean((h - mean) ** 2, axis=-1, keepdims=True)
    h = (h - mean) / jnp.sqrt(var + 1e-5) * gamma.astype(jnp.float32) + beta.astype(jnp.float32)
    o = (h @ w2.astype(jnp.float32).T + b2.astype(jnp.float32))[..., 0]
    return (o + jnp.swapaxes(o, -1, -2)) * 0.5


if __name__ == "__main__":
    B, S, H = 2, 8, 32
    key = jax.random.PRNGKey(0)
    kx, km, kw1, kb1, kg, kbe, kw2, kb2, kx2, km2 = jax.random.split(key, 10)

    def make_input(k_val, k_mask, b, s, h):
        xv = jax.random.normal(k_val, (b, s, s, h), dtype=jnp.float32)
        m = jax.random.bernoulli(k_mask, p=0.05, shape=(b, s, s, h))
        xv = jnp.where(m, -jnp.inf, xv)
        return xv.astype(jnp.bfloat16)      # bf16 activations: half the HBM read

    x = make_input(kx, km, B, S, H)

    # Parameters in PyTorch layouts (nn.Linear stores weight as (out, in)).
    w1 = jax.random.normal(kw1, (H, H), dtype=jnp.float32) * 0.05        # dense.weight
    b1 = jax.random.normal(kb1, (H,), dtype=jnp.float32) * 0.05          # dense.bias
    gamma = 1.0 + 0.1 * jax.random.normal(kg, (H,), dtype=jnp.float32)   # layer_norm.weight
    beta = 0.1 * jax.random.normal(kbe, (H,), dtype=jnp.float32)         # layer_norm.bias
    w2 = jax.random.normal(kw2, (1, H), dtype=jnp.float32) * 0.05        # out_proj.weight
    b2 = jax.random.normal(kb2, (1,), dtype=jnp.float32) * 0.05          # out_proj.bias
    params = (w1, b1, gamma, beta, w2, b2)

    # 1) Default path: bf16 input, tanh gelu (EUP), auto-sized single tile.
    out = jax.block_until_ready(distance_head_forward(x, *params))
    ref = _reference_forward(x, *params, approx_gelu=True)
    assert out.shape == (B, S, S)
    assert jnp.allclose(out, ref, atol=1e-2, rtol=1e-2), "mismatch (approx-gelu path)"

    # 2) Exact-erf gelu for torch F.gelu parity.
    out_e = jax.block_until_ready(distance_head_forward(x, *params, approx_gelu=False))
    ref_e = _reference_forward(x, *params, approx_gelu=False)
    assert jnp.allclose(out_e, ref_e, atol=1e-2, rtol=1e-2), "mismatch (exact-gelu path)"

    # 3) Multi-tile grid with a partial last block (no padding copy):
    #    N = 2*24*24 = 1152 -> 288 packed rows; tile_rows=512 -> three 128-row tiles.
    B3, S3 = 2, 24
    x3 = make_input(kx2, km2, B3, S3, H)
    out3 = jax.block_until_ready(distance_head_forward(x3, *params, tile_rows=512))
    ref3 = _reference_forward(x3, *params, approx_gelu=True)
    assert out3.shape == (B3, S3, S3)
    assert jnp.allclose(out3, ref3, atol=1e-2, rtol=1e-2), "mismatch (partial-block path)"

    print("KERNEL_OK")
</pallas_src>

<mosaic_0001>
module attributes {stable_mosaic.version = 11 : i64} {
  func.func @_distance_head_kernel(%arg0: i32, %arg1: memref<32x128xbf16, #tpu.memory_space<vmem>>, %arg2: memref<128x128xbf16, #tpu.memory_space<vmem>>, %arg3: memref<32x1xf32, #tpu.memory_space<vmem>>, %arg4: memref<32x1xf32, #tpu.memory_space<vmem>>, %arg5: memref<2xf32, #tpu.memory_space<smem>>, %arg6: memref<4x32xf32, #tpu.memory_space<vmem>>) attributes {dimension_semantics = [#tpu.dimension_semantics<parallel>], iteration_bounds = array<i64: 1>, scalar_prefetch = 0 : i64, scratch_operands = 0 : i64, tpu.core_type = #tpu.core_type<tc>, window_params = [{transform_indices = @transform_0, window_bounds = array<i64: 32, 128>}, {pipeline_mode = #tpu.pipeline_mode<synchronous>, transform_indices = @transform_1, window_bounds = array<i64: 128, 128>}, {pipeline_mode = #tpu.pipeline_mode<synchronous>, transform_indices = @transform_2, window_bounds = array<i64: 32, 1>}, {pipeline_mode = #tpu.pipeline_mode<synchronous>, transform_indices = @transform_3, window_bounds = array<i64: 32, 1>}, {transform_indices = @transform_4, window_bounds = array<i64: 2>}, {transform_indices = @transform_5, window_bounds = array<i64: 4, 32>}]} {
    %c0 = arith.constant 0 : index
    %c0_0 = arith.constant 0 : index
    %0 = vector.load %arg1[%c0, %c0_0] : memref<32x128xbf16, #tpu.memory_space<vmem>>, vector<32x128xbf16>
    %cst = arith.constant 0xFF80 : bf16
    %1 = vector.broadcast %cst : bf16 to vector<32x128xbf16>
    %2 = arith.cmpf oeq, %0, %1 : vector<32x128xbf16>
    %cst_1 = arith.constant 0.000000e+00 : bf16
    %3 = vector.broadcast %cst_1 : bf16 to vector<32x128xbf16>
    %4 = arith.select %2, %3, %0 : vector<32x128xi1>, vector<32x128xbf16>
    %c0_2 = arith.constant 0 : index
    %c0_3 = arith.constant 0 : index
    %5 = vector.load %arg2[%c0_2, %c0_3] : memref<128x128xbf16, #tpu.memory_space<vmem>>, vector<128x128xbf16>
    %cst_4 = arith.constant dense<0.000000e+00> : vector<128x32xf32>
    %6 = tpu.matmul %5, %4, %cst_4 {dimension_numbers = #tpu.dot_dimension_numbers<[1], [1], [0], [0], [0, 0, 1, 0], [], []>} : vector<128x128xbf16>, vector<32x128xbf16>, vector<128x32xf32> -> vector<128x32xf32>
    %c0_5 = arith.constant 0 : index
    %c0_6 = arith.constant 0 : index
    %7 = vector.load %arg3[%c0_5, %c0_6] : memref<32x1xf32, #tpu.memory_space<vmem>>, vector<32x1xf32>
    %c0_7 = arith.constant 0 : index
    %c0_8 = arith.constant 0 : index
    %8 = vector.load %arg4[%c0_7, %c0_8] : memref<32x1xf32, #tpu.memory_space<vmem>>, vector<32x1xf32>
    %c0_9 = arith.constant 0 : index
    %9 = memref.load %arg5[%c0_9] : memref<2xf32, #tpu.memory_space<smem>>
    %c1 = arith.constant 1 : index
    %10 = memref.load %arg5[%c1] : memref<2xf32, #tpu.memory_space<smem>>
    %11 = vector.extract_strided_slice %6 {offsets = [0, 0], sizes = [32, 32], strides = [1, 1]} : vector<128x32xf32> to vector<32x32xf32>
    %12 = vector.broadcast %7 : vector<32x1xf32> to vector<32x32xf32>
    %13 = arith.addf %11, %12 : vector<32x32xf32>
    %14 = arith.mulf %13, %13 : vector<32x32xf32>
    %15 = arith.mulf %13, %14 : vector<32x32xf32>
    %cst_10 = arith.constant 4.471500e-02 : f32
    %16 = vector.broadcast %cst_10 : f32 to vector<32x32xf32>
    %17 = arith.mulf %16, %15 : vector<32x32xf32>
    %18 = arith.addf %13, %17 : vector<32x32xf32>
    %cst_11 = arith.constant 0.797884583 : f32
    %19 = vector.broadcast %cst_11 : f32 to vector<32x32xf32>
    %20 = arith.mulf %19, %18 : vector<32x32xf32>
    %21 = math.tanh %20 : vector<32x32xf32>
    %cst_12 = arith.constant 1.000000e+00 : f32
    %22 = vector.broadcast %cst_12 : f32 to vector<32x32xf32>
    %23 = arith.addf %22, %21 : vector<32x32xf32>
    %cst_13 = arith.constant 5.000000e-01 : f32
    %24 = vector.broadcast %cst_13 : f32 to vector<32x32xf32>
    %25 = arith.mulf %24, %23 : vector<32x32xf32>
    %26 = arith.mulf %13, %25 : vector<32x32xf32>
    %cst_14 = arith.constant dense<0.000000e+00> : vector<32xf32>
    %27 = vector.multi_reduction <add>, %26, %cst_14 [0] : vector<32x32xf32> to vector<32xf32>
    %28 = vector.shape_cast %27 : vector<32xf32> to vector<1x32xf32>
    %29 = arith.mulf %26, %26 : vector<32x32xf32>
    %cst_15 = arith.constant dense<0.000000e+00> : vector<32xf32>
    %30 = vector.multi_reduction <add>, %29, %cst_15 [0] : vector<32x32xf32> to vector<32xf32>
    %31 = vector.shape_cast %30 : vector<32xf32> to vector<1x32xf32>
    %32 = vector.broadcast %8 : vector<32x1xf32> to vector<32x32xf32>
    %33 = arith.mulf %26, %32 : vector<32x32xf32>
    %cst_16 = arith.constant dense<0.000000e+00> : vector<32xf32>
    %34 = vector.multi_reduction <add>, %33, %cst_16 [0] : vector<32x32xf32> to vector<32xf32>
    %35 = vector.shape_cast %34 : vector<32xf32> to vector<1x32xf32>
    %cst_17 = arith.constant 3.125000e-02 : f32
    %36 = vector.broadcast %cst_17 : f32 to vector<1x32xf32>
    %37 = arith.mulf %28, %36 : vector<1x32xf32>
    %cst_18 = arith.constant 3.125000e-02 : f32
    %38 = vector.broadcast %cst_18 : f32 to vector<1x32xf32>
    %39 = arith.mulf %31, %38 : vector<1x32xf32>
    %40 = arith.mulf %37, %37 : vector<1x32xf32>
    %41 = arith.subf %39, %40 : vector<1x32xf32>
    %cst_19 = arith.constant 9.99999974E-6 : f32
    %42 = vector.broadcast %cst_19 : f32 to vector<1x32xf32>
    %43 = arith.addf %41, %42 : vector<1x32xf32>
    %44 = math.rsqrt %43 : vector<1x32xf32>
    %45 = vector.broadcast %9 : f32 to vector<1x32xf32>
    %46 = arith.mulf %37, %45 : vector<1x32xf32>
    %47 = arith.subf %35, %46 : vector<1x32xf32>
    %48 = arith.mulf %44, %47 : vector<1x32xf32>
    %49 = vector.broadcast %10 : f32 to vector<1x32xf32>
    %50 = arith.addf %48, %49 : vector<1x32xf32>
    %c0_20 = arith.constant 0 : index
    %c0_21 = arith.constant 0 : index
    %51 = vector.load %arg6[%c0_20, %c0_21] : memref<4x32xf32, #tpu.memory_space<vmem>>, vector<1x32xf32>
    tpu.vector_store %arg6[%c0_20, %c0_21], %50 {strides = array<i32>} : memref<4x32xf32, #tpu.memory_space<vmem>>, vector<1x32xf32>,
    %52 = vector.extract_strided_slice %6 {offsets = [32, 0], sizes = [32, 32], strides = [1, 1]} : vector<128x32xf32> to vector<32x32xf32>
    %53 = vector.broadcast %7 : vector<32x1xf32> to vector<32x32xf32>
    %54 = arith.addf %52, %53 : vector<32x32xf32>
    %55 = arith.mulf %54, %54 : vector<32x32xf32>
    %56 = arith.mulf %54, %55 : vector<32x32xf32>
    %cst_22 = arith.constant 4.471500e-02 : f32
    %57 = vector.broadcast %cst_22 : f32 to vector<32x32xf32>
    %58 = arith.mulf %57, %56 : vector<32x32xf32>
    %59 = arith.addf %54, %58 : vector<32x32xf32>
    %cst_23 = arith.constant 0.797884583 : f32
    %60 = vector.broadcast %cst_23 : f32 to vector<32x32xf32>
    %61 = arith.mulf %60, %59 : vector<32x32xf32>
    %62 = math.tanh %61 : vector<32x32xf32>
    %cst_24 = arith.constant 1.000000e+00 : f32
    %63 = vector.broadcast %cst_24 : f32 to vector<32x32xf32>
    %64 = arith.addf %63, %62 : vector<32x32xf32>
    %cst_25 = arith.constant 5.000000e-01 : f32
    %65 = vector.broadcast %cst_25 : f32 to vector<32x32xf32>
    %66 = arith.mulf %65, %64 : vector<32x32xf32>
    %67 = arith.mulf %54, %66 : vector<32x32xf32>
    %cst_26 = arith.constant dense<0.000000e+00> : vector<32xf32>
    %68 = vector.multi_reduction <add>, %67, %cst_26 [0] : vector<32x32xf32> to vector<32xf32>
    %69 = vector.shape_cast %68 : vector<32xf32> to vector<1x32xf32>
    %70 = arith.mulf %67, %67 : vector<32x32xf32>
    %cst_27 = arith.constant dense<0.000000e+00> : vector<32xf32>
    %71 = vector.multi_reduction <add>, %70, %cst_27 [0] : vector<32x32xf32> to vector<32xf32>
    %72 = vector.shape_cast %71 : vector<32xf32> to vector<1x32xf32>
    %73 = vector.broadcast %8 : vector<32x1xf32> to vector<32x32xf32>
    %74 = arith.mulf %67, %73 : vector<32x32xf32>
    %cst_28 = arith.constant dense<0.000000e+00> : vector<32xf32>
    %75 = vector.multi_reduction <add>, %74, %cst_28 [0] : vector<32x32xf32> to vector<32xf32>
    %76 = vector.shape_cast %75 : vector<32xf32> to vector<1x32xf32>
    %cst_29 = arith.constant 3.125000e-02 : f32
    %77 = vector.broadcast %cst_29 : f32 to vector<1x32xf32>
    %78 = arith.mulf %69, %77 : vector<1x32xf32>
    %cst_30 = arith.constant 3.125000e-02 : f32
    %79 = vector.broadcast %cst_30 : f32 to vector<1x32xf32>
    %80 = arith.mulf %72, %79 : vector<1x32xf32>
    %81 = arith.mulf %78, %78 : vector<1x32xf32>
    %82 = arith.subf %80, %81 : vector<1x32xf32>
    %cst_31 = arith.constant 9.99999974E-6 : f32
    %83 = vector.broadcast %cst_31 : f32 to vector<1x32xf32>
    %84 = arith.addf %82, %83 : vector<1x32xf32>
    %85 = math.rsqrt %84 : vector<1x32xf32>
    %86 = vector.broadcast %9 : f32 to vector<1x32xf32>
    %87 = arith.mulf %78, %86 : vector<1x32xf32>
    %88 = arith.subf %76, %87 : vector<1x32xf32>
    %89 = arith.mulf %85, %88 : vector<1x32xf32>
    %90 = vector.broadcast %10 : f32 to vector<1x32xf32>
    %91 = arith.addf %89, %90 : vector<1x32xf32>
    %c1_32 = arith.constant 1 : index
    %c0_33 = arith.constant 0 : index
    %92 = vector.load %arg6[%c1_32, %c0_33] : memref<4x32xf32, #tpu.memory_space<vmem>>, vector<1x32xf32>
    tpu.vector_store %arg6[%c1_32, %c0_33], %91 {strides = array<i32>} : memref<4x32xf32, #tpu.memory_space<vmem>>, vector<1x32xf32>,
    %93 = vector.extract_strided_slice %6 {offsets = [64, 0], sizes = [32, 32], strides = [1, 1]} : vector<128x32xf32> to vector<32x32xf32>
    %94 = vector.broadcast %7 : vector<32x1xf32> to vector<32x32xf32>
    %95 = arith.addf %93, %94 : vector<32x32xf32>
    %96 = arith.mulf %95, %95 : vector<32x32xf32>
    %97 = arith.mulf %95, %96 : vector<32x32xf32>
    %cst_34 = arith.constant 4.471500e-02 : f32
    %98 = vector.broadcast %cst_34 : f32 to vector<32x32xf32>
    %99 = arith.mulf %98, %97 : vector<32x32xf32>
    %100 = arith.addf %95, %99 : vector<32x32xf32>
    %cst_35 = arith.constant 0.797884583 : f32
    %101 = vector.broadcast %cst_35 : f32 to vector<32x32xf32>
    %102 = arith.mulf %101, %100 : vector<32x32xf32>
    %103 = math.tanh %102 : vector<32x32xf32>
    %cst_36 = arith.constant 1.000000e+00 : f32
    %104 = vector.broadcast %cst_36 : f32 to vector<32x32xf32>
    %105 = arith.addf %104, %103 : vector<32x32xf32>
    %cst_37 = arith.constant 5.000000e-01 : f32
    %106 = vector.broadcast %cst_37 : f32 to vector<32x32xf32>
    %107 = arith.mulf %106, %105 : vector<32x32xf32>
    %108 = arith.mulf %95, %107 : vector<32x32xf32>
    %cst_38 = arith.constant dense<0.000000e+00> : vector<32xf32>
    %109 = vector.multi_reduction <add>, %108, %cst_38 [0] : vector<32x32xf32> to vector<32xf32>
    %110 = vector.shape_cast %109 : vector<32xf32> to vector<1x32xf32>
    %111 = arith.mulf %108, %108 : vector<32x32xf32>
    %cst_39 = arith.constant dense<0.000000e+00> : vector<32xf32>
    %112 = vector.multi_reduction <add>, %111, %cst_39 [0] : vector<32x32xf32> to vector<32xf32>
    %113 = vector.shape_cast %112 : vector<32xf32> to vector<1x32xf32>
    %114 = vector.broadcast %8 : vector<32x1xf32> to vector<32x32xf32>
    %115 = arith.mulf %108, %114 : vector<32x32xf32>
    %cst_40 = arith.constant dense<0.000000e+00> : vector<32xf32>
    %116 = vector.multi_reduction <add>, %115, %cst_40 [0] : vector<32x32xf32> to vector<32xf32>
    %117 = vector.shape_cast %116 : vector<32xf32> to vector<1x32xf32>
    %cst_41 = arith.constant 3.125000e-02 : f32
    %118 = vector.broadcast %cst_41 : f32 to vector<1x32xf32>
    %119 = arith.mulf %110, %118 : vector<1x32xf32>
    %cst_42 = arith.constant 3.125000e-02 : f32
    %120 = vector.broadcast %cst_42 : f32 to vector<1x32xf32>
    %121 = arith.mulf %113, %120 : vector<1x32xf32>
    %122 = arith.mulf %119, %119 : vector<1x32xf32>
    %123 = arith.subf %121, %122 : vector<1x32xf32>
    %cst_43 = arith.constant 9.99999974E-6 : f32
    %124 = vector.broadcast %cst_43 : f32 to vector<1x32xf32>
    %125 = arith.addf %123, %124 : vector<1x32xf32>
    %126 = math.rsqrt %125 : vector<1x32xf32>
    %127 = vector.broadcast %9 : f32 to vector<1x32xf32>
    %128 = arith.mulf %119, %127 : vector<1x32xf32>
    %129 = arith.subf %117, %128 : vector<1x32xf32>
    %130 = arith.mulf %126, %129 : vector<1x32xf32>
    %131 = vector.broadcast %10 : f32 to vector<1x32xf32>
    %132 = arith.addf %130, %131 : vector<1x32xf32>
    %c2 = arith.constant 2 : index
    %c0_44 = arith.constant 0 : index
    %133 = vector.load %arg6[%c2, %c0_44] : memref<4x32xf32, #tpu.memory_space<vmem>>, vector<1x32xf32>
    tpu.vector_store %arg6[%c2, %c0_44], %132 {strides = array<i32>} : memref<4x32xf32, #tpu.memory_space<vmem>>, vector<1x32xf32>,
    %134 = vector.extract_strided_slice %6 {offsets = [96, 0], sizes = [32, 32], strides = [1, 1]} : vector<128x32xf32> to vector<32x32xf32>
    %135 = vector.broadcast %7 : vector<32x1xf32> to vector<32x32xf32>
    %136 = arith.addf %134, %135 : vector<32x32xf32>
    %137 = arith.mulf %136, %136 : vector<32x32xf32>
    %138 = arith.mulf %136, %137 : vector<32x32xf32>
    %cst_45 = arith.constant 4.471500e-02 : f32
    %139 = vector.broadcast %cst_45 : f32 to vector<32x32xf32>
    %140 = arith.mulf %139, %138 : vector<32x32xf32>
    %141 = arith.addf %136, %140 : vector<32x32xf32>
    %cst_46 = arith.constant 0.797884583 : f32
    %142 = vector.broadcast %cst_46 : f32 to vector<32x32xf32>
    %143 = arith.mulf %142, %141 : vector<32x32xf32>
    %144 = math.tanh %143 : vector<32x32xf32>
    %cst_47 = arith.constant 1.000000e+00 : f32
    %145 = vector.broadcast %cst_47 : f32 to vector<32x32xf32>
    %146 = arith.addf %145, %144 : vector<32x32xf32>
    %cst_48 = arith.constant 5.000000e-01 : f32
    %147 = vector.broadcast %cst_48 : f32 to vector<32x32xf32>
    %148 = arith.mulf %147, %146 : vector<32x32xf32>
    %149 = arith.mulf %136, %148 : vector<32x32xf32>
    %cst_49 = arith.constant dense<0.000000e+00> : vector<32xf32>
    %150 = vector.multi_reduction <add>, %149, %cst_49 [0] : vector<32x32xf32> to vector<32xf32>
    %151 = vector.shape_cast %150 : vector<32xf32> to vector<1x32xf32>
    %152 = arith.mulf %149, %149 : vector<32x32xf32>
    %cst_50 = arith.constant dense<0.000000e+00> : vector<32xf32>
    %153 = vector.multi_reduction <add>, %152, %cst_50 [0] : vector<32x32xf32> to vector<32xf32>
    %154 = vector.shape_cast %153 : vector<32xf32> to vector<1x32xf32>
    %155 = vector.broadcast %8 : vector<32x1xf32> to vector<32x32xf32>
    %156 = arith.mulf %149, %155 : vector<32x32xf32>
    %cst_51 = arith.constant dense<0.000000e+00> : vector<32xf32>
    %157 = vector.multi_reduction <add>, %156, %cst_51 [0] : vector<32x32xf32> to vector<32xf32>
    %158 = vector.shape_cast %157 : vector<32xf32> to vector<1x32xf32>
    %cst_52 = arith.constant 3.125000e-02 : f32
    %159 = vector.broadcast %cst_52 : f32 to vector<1x32xf32>
    %160 = arith.mulf %151, %159 : vector<1x32xf32>
    %cst_53 = arith.constant 3.125000e-02 : f32
    %161 = vector.broadcast %cst_53 : f32 to vector<1x32xf32>
    %162 = arith.mulf %154, %161 : vector<1x32xf32>
    %163 = arith.mulf %160, %160 : vector<1x32xf32>
    %164 = arith.subf %162, %163 : vector<1x32xf32>
    %cst_54 = arith.constant 9.99999974E-6 : f32
    %165 = vector.broadcast %cst_54 : f32 to vector<1x32xf32>
    %166 = arith.addf %164, %165 : vector<1x32xf32>
    %167 = math.rsqrt %166 : vector<1x32xf32>
    %168 = vector.broadcast %9 : f32 to vector<1x32xf32>
    %169 = arith.mulf %160, %168 : vector<1x32xf32>
    %170 = arith.subf %158, %169 : vector<1x32xf32>
    %171 = arith.mulf %167, %170 : vector<1x32xf32>
    %172 = vector.broadcast %10 : f32 to vector<1x32xf32>
    %173 = arith.addf %171, %172 : vector<1x32xf32>
    %c3 = arith.constant 3 : index
    %c0_55 = arith.constant 0 : index
    %174 = vector.load %arg6[%c3, %c0_55] : memref<4x32xf32, #tpu.memory_space<vmem>>, vector<1x32xf32>
    tpu.vector_store %arg6[%c3, %c0_55], %173 {strides = array<i32>} : memref<4x32xf32, #tpu.memory_space<vmem>>, vector<1x32xf32>,
    return
  }
  func.func @transform_0(%arg0: i32) -> (i32, i32) {
    %c0_i32 = arith.constant 0 : i32
    %c0_i32_0 = arith.constant 0 : i32
    return %arg0, %c0_i32 : i32, i32
  }
  func.func @transform_1(%arg0: i32) -> (i32, i32) {
    %c0_i32 = arith.constant 0 : i32
    %c0_i32_0 = arith.constant 0 : i32
    %c0_i32_1 = arith.constant 0 : i32
    return %c0_i32, %c0_i32_0 : i32, i32
  }
  func.func @transform_2(%arg0: i32) -> (i32, i32) {
    %c0_i32 = arith.constant 0 : i32
    %c0_i32_0 = arith.constant 0 : i32
    %c0_i32_1 = arith.constant 0 : i32
    return %c0_i32, %c0_i32_0 : i32, i32
  }
  func.func @transform_3(%arg0: i32) -> (i32, i32) {
    %c0_i32 = arith.constant 0 : i32
    %c0_i32_0 = arith.constant 0 : i32
    %c0_i32_1 = arith.constant 0 : i32
    return %c0_i32, %c0_i32_0 : i32, i32
  }
  func.func @transform_4(%arg0: i32) -> i32 {
    %c0_i32 = arith.constant 0 : i32
    %c0_i32_0 = arith.constant 0 : i32
    return %c0_i32 : i32
  }
  func.func @transform_5(%arg0: i32) -> (i32, i32) {
    %c0_i32 = arith.constant 0 : i32
    %c0_i32_0 = arith.constant 0 : i32
    return %c0_i32, %arg0 : i32, i32
  }
}

</mosaic_0001>

<llo_original>
// kernel: distance_head_forward.1
$region0: #{distance_head_forward.1}
  #allocation0 [shape = 'u32[]', space=smem, size = 0x4, offset = 0x4, fixed_abs, tag = 'smem constant byte address 0x4 - core index']
  #allocation1 [shape = 'u32[144,128]{1,0:T(1,128)}', space=vmem, size = 0x12000, scoped, tag = 'internal scratch']
  %s0 = inlined_call_operand.vmem [shape: bf16[32,128], index: 0, kind: input, shape index: {}]
  %s1 = inlined_call_operand.vmem [shape: bf16[128,128], index: 1, kind: input, shape index: {}]
  %s2 = inlined_call_operand.vmem [shape: f32[32,1], index: 2, kind: input, shape index: {}]
  %s3 = inlined_call_operand.vmem [shape: f32[32,1], index: 3, kind: input, shape index: {}]
  %s4 = inlined_call_operand.vmem [shape: f32[2], index: 4, kind: input, shape index: {}]
  %s5 = inlined_call_operand.vmem [shape: f32[4,32], index: 5, kind: output, shape index: {}]
  %s6 = sld [smem:[#allocation0]]
  $region34: #{distance_head_forward.1} parent=0
    _
  %s8 = ssub.s32 1, %s6
  %s9 = scalar_select 0, %s8, %s6
  $region1: #{distance_head_forward.1} parent=0
    #allocation2 [shape = 'u8[512]{0}', space=smem, size = 0x200, scoped, tag = 'input window, operand 4, single buffered']
    #allocation3 [shape = 's32[1]{0}', space=sflag, size = 0x4, scoped, tag = 'scoped memory for distance_head_forward.1']
    %10 = vsyncpa [#allocation3], 0
    // Predicated region
    $region2: #{distance_head_forward.1} parent=1 // pred_check
      _
    $region3: #{distance_head_forward.1} parent=1 // pred_check_branch
      %12 = sbr.rel (0) target = $region5
    $region4: #{distance_head_forward.1} parent=1 // pred_region
      _
    $region5: #{distance_head_forward.1} parent=1 // pred_fallthru
      _
    // Predicated region
    $region6: #{distance_head_forward.1} parent=1 // pred_check
      _
    $region7: #{distance_head_forward.1} parent=1 // pred_check_branch
      %14 = sbr.rel (0) target = $region9
    $region8: #{distance_head_forward.1} parent=1 // pred_region
      _
    $region9: #{distance_head_forward.1} parent=1 // pred_fallthru
      _
    // Predicated region
    $region10: #{distance_head_forward.1} parent=1 // pred_check
      _
    $region11: #{distance_head_forward.1} parent=1 // pred_check_branch
      %16 = sbr.rel (0) target = $region13
    $region12: #{distance_head_forward.1} parent=1 // pred_region
      _
    $region13: #{distance_head_forward.1} parent=1 // pred_fallthru
      _
    // Predicated region
    $region14: #{distance_head_forward.1} parent=1 // pred_check
      _
    $region15: #{distance_head_forward.1} parent=1 // pred_check_branch
      %18 = sbr.rel (0) target = $region17
    $region16: #{distance_head_forward.1} parent=1 // pred_region
      _
    $region17: #{distance_head_forward.1} parent=1 // pred_fallthru
      _
    // Predicated region
    $region18: #{distance_head_forward.1} parent=1 // pred_check
      _
    $region19: #{distance_head_forward.1} parent=1 // pred_check_branch
      %20 = sbr.rel (0) target = $region21
    $region20: #{distance_head_forward.1} parent=1 // pred_region
      %s22 = ssub.s32 16, 16
      %23 = vsyncadd [#allocation3], %s22
      %s25 = sshll.u32 %s4, 4
      %s26 = int_to_ptr.vmem [resolvable:$true] %s25
      %28 = dma.vmem_to_smem %s26, 16, [#allocation2], [#allocation3]
    $region21: #{distance_head_forward.1} parent=1 // pred_fallthru
      _
    // Predicated region
    $region22: #{distance_head_forward.1} parent=1 // pred_check
      _
    $region23: #{distance_head_forward.1} parent=1 // pred_check_branch
      %30 = sbr.rel (0) target = $region25
    $region24: #{distance_head_forward.1} parent=1 // pred_region
      %31 = dma.done [#allocation3], 16
    $region25: #{distance_head_forward.1} parent=1 // pred_fallthru
      _
    %32 = sfence
    %v35 = vld [vmem:[%s0] sm:$0xf]
    %v36 = vld [vmem:[%s0 + $0x4] sm:$0xf]
    %v37 = vld [vmem:[%s0 + $0x8] sm:$0xf]
    %v38 = vld [vmem:[%s0 + $0xc] sm:$0xf]
    %vm39 = vcmp.eq.bf16.partialorder %v35, 4286644096
    %vm40 = vcmp.eq.bf16.partialorder %v36, 4286644096
    %vm41 = vcmp.eq.bf16.partialorder %v37, 4286644096
    %vm42 = vcmp.eq.bf16.partialorder %v38, 4286644096
    %v43 = vsel %vm39, 0, %v35
    %v44 = vsel %vm40, 0, %v36
    %v45 = vsel %vm41, 0, %v37
    %v46 = vsel %vm42, 0, %v38
    %v47 = vld [vmem:[%s1] sm:$0xf]
    %v48 = vld [vmem:[%s1 + $0x4] sm:$0xf]
    %v49 = vld [vmem:[%s1 + $0x8] sm:$0xf]
    %v50 = vld [vmem:[%s1 + $0xc] sm:$0xf]
    %v51 = vld [vmem:[%s1 + $0x10] sm:$0xf]
    %v52 = vld [vmem:[%s1 + $0x14] sm:$0xf]
    %v53 = vld [vmem:[%s1 + $0x18] sm:$0xf]
    %v54 = vld [vmem:[%s1 + $0x1c] sm:$0xf]
    %v55 = vld [vmem:[%s1 + $0x20] sm:$0xf]
    %v56 = vld [vmem:[%s1 + $0x24] sm:$0xf]
    %v57 = vld [vmem:[%s1 + $0x28] sm:$0xf]
    %v58 = vld [vmem:[%s1 + $0x2c] sm:$0xf]
    %v59 = vld [vmem:[%s1 + $0x30] sm:$0xf]
    %v60 = vld [vmem:[%s1 + $0x34] sm:$0xf]
    %v61 = vld [vmem:[%s1 + $0x38] sm:$0xf]
    %v62 = vld [vmem:[%s1 + $0x3c] sm:$0xf]
    %v79 = vunpack.c.l.b16 %v47
    %v80 = vunpack.c.l.b16 %v48
    %v81 = vunpack.c.l.b16 %v49
    %v82 = vunpack.c.l.b16 %v50
    %v83 = vunpack.c.l.b16 %v51
    %v84 = vunpack.c.l.b16 %v52
    %v85 = vunpack.c.l.b16 %v53
    %v86 = vunpack.c.l.b16 %v54
    %v87 = vunpack.c.l.b16 %v55
    %v88 = vunpack.c.l.b16 %v56
    %v89 = vunpack.c.l.b16 %v57
    %v90 = vunpack.c.l.b16 %v58
    %v91 = vunpack.c.l.b16 %v59
    %v92 = vunpack.c.l.b16 %v60
    %v93 = vunpack.c.l.b16 %v61
    %v94 = vunpack.c.l.b16 %v62
    %v95 = vpack.c.b16 %v80, %v79
    %v96 = vpack.c.b16 %v82, %v81
    %v97 = vpack.c.b16 %v84, %v83
    %v98 = vpack.c.b16 %v86, %v85
    %v99 = vpack.c.b16 %v88, %v87
    %v100 = vpack.c.b16 %v90, %v89
    %v101 = vpack.c.b16 %v92, %v91
    %v102 = vpack.c.b16 %v94, %v93
    %v115 = vunpack.c.l.b16 %v43
    %v116 = vunpack.c.l.b16 %v44
    %v117 = vunpack.c.l.b16 %v45
    %v118 = vunpack.c.l.b16 %v46
    %v119 = vpack.c.b16 %v116, %v115
    %v120 = vpack.c.b16 %v118, %v117
    %123 = vmatprep.subr.bf16.mxu0 0
    %124 = vmatpush1.bf16.xpose.msra.mxu0 %v119
    %125 = vmatprep.subr.bf16.mxu0 0
    %126 = vmatpush1.bf16.xpose.msra.mxu0 %v120
    %127 = vmatprep.subr.bf16.mxu0 0
    %128 = vmatpush1.bf16.xpose.msra.mxu0 0
    %129 = vmatprep.subr.bf16.mxu0 0
    %130 = vmatpush1.bf16.xpose.msra.mxu0 0
    %131 = vmatprep.subr.bf16.mxu0 0
    %132 = vmatpush1.bf16.xpose.msra.mxu0 0
    %133 = vmatprep.subr.bf16.mxu0 0
    %134 = vmatpush1.bf16.xpose.msra.mxu0 0
    %135 = vmatprep.subr.bf16.mxu0 0
    %136 = vmatpush1.bf16.xpose.msra.mxu0 0
    %137 = vmatprep.subr.bf16.mxu0 0
    %138 = vmatpush1.bf16.xpose.msra.mxu0 0
    %139 = vmatprep.subr.bf16.mxu0 0
    %140 = vmatpush1.bf16.xpose.msra.mxu0 0
    %141 = vmatprep.subr.bf16.mxu0 0
    %142 = vmatpush1.bf16.xpose.msra.mxu0 0
    %143 = vmatprep.subr.bf16.mxu0 0
    %144 = vmatpush1.bf16.xpose.msra.mxu0 0
    %145 = vmatprep.subr.bf16.mxu0 0
    %146 = vmatpush1.bf16.xpose.msra.mxu0 0
    %147 = vmatprep.subr.bf16.mxu0 0
    %148 = vmatpush1.bf16.xpose.msra.mxu0 0
    %149 = vmatprep.subr.bf16.mxu0 0
    %150 = vmatpush1.bf16.xpose.msra.mxu0 0
    %151 = vmatprep.subr.bf16.mxu0 0
    %152 = vmatpush1.bf16.xpose.msra.mxu0 0
    %153 = vmatprep.subr.bf16.mxu0 0
    %154 = vmatpush1.bf16.xpose.msra.mxu0 0
    %155 = vmatprep.mubr.bf16.mxu0 0
    %156 = vmatmul.mubr.bf16.gmra.mrb[0].mxu0 %v95
    %v157 = vpop.f32.mrb[0].mxu0
    %v158 = vadd.f32 0.0, %v157
    %v159 = vpop.f32.mrb[0].mxu0
    %v160 = vpop.f32.mrb[0].mxu0
    %v161 = vadd.f32 0.0, %v160
    %v162 = vpop.f32.mrb[0].mxu0
    %163 = vmatprep.mubr.bf16.mxu0 0
    %164 = vmatmul.mubr.bf16.gmra.mrb[0].mxu0 %v96
    %v165 = vpop.f32.mrb[0].mxu0
    %v166 = vadd.f32 0.0, %v165
    %v167 = vpop.f32.mrb[0].mxu0
    %v168 = vpop.f32.mrb[0].mxu0
    %v169 = vadd.f32 0.0, %v168
    %v170 = vpop.f32.mrb[0].mxu0
    %171 = vmatprep.mubr.bf16.mxu0 0
    %172 = vmatmul.mubr.bf16.gmra.mrb[0].mxu0 %v97
    %v173 = vpop.f32.mrb[0].mxu0
    %v174 = vadd.f32 0.0, %v173
    %v175 = vpop.f32.mrb[0].mxu0
    %v176 = vpop.f32.mrb[0].mxu0
    %v177 = vadd.f32 0.0, %v176
    %v178 = vpop.f32.mrb[0].mxu0
    %179 = vmatprep.mubr.bf16.mxu0 0
    %180 = vmatmul.mubr.bf16.gmra.mrb[0].mxu0 %v98
    %v181 = vpop.f32.mrb[0].mxu0
    %v182 = vadd.f32 0.0, %v181
    %v183 = vpop.f32.mrb[0].mxu0
    %v184 = vpop.f32.mrb[0].mxu0
    %v185 = vadd.f32 0.0, %v184
    %v186 = vpop.f32.mrb[0].mxu0
    %187 = vmatprep.mubr.bf16.mxu0 0
    %188 = vmatmul.mubr.bf16.gmra.mrb[0].mxu0 %v99
    %v189 = vpop.f32.mrb[0].mxu0
    %v190 = vadd.f32 0.0, %v189
    %v191 = vpop.f32.mrb[0].mxu0
    %v192 = vpop.f32.mrb[0].mxu0
    %v193 = vadd.f32 0.0, %v192
    %v194 = vpop.f32.mrb[0].mxu0
    %195 = vmatprep.mubr.bf16.mxu0 0
    %196 = vmatmul.mubr.bf16.gmra.mrb[0].mxu0 %v100
    %v197 = vpop.f32.mrb[0].mxu0
    %v198 = vadd.f32 0.0, %v197
    %v199 = vpop.f32.mrb[0].mxu0
    %v200 = vpop.f32.mrb[0].mxu0
    %v201 = vadd.f32 0.0, %v200
    %v202 = vpop.f32.mrb[0].mxu0
    %203 = vmatprep.mubr.bf16.mxu0 0
    %204 = vmatmul.mubr.bf16.gmra.mrb[0].mxu0 %v101
    %v205 = vpop.f32.mrb[0].mxu0
    %v206 = vadd.f32 0.0, %v205
    %v207 = vpop.f32.mrb[0].mxu0
    %v208 = vpop.f32.mrb[0].mxu0
    %v209 = vadd.f32 0.0, %v208
    %v210 = vpop.f32.mrb[0].mxu0
    %211 = vmatprep.mubr.bf16.mxu0 0
    %212 = vmatmul.mubr.bf16.gmra.mrb[0].mxu0 %v102
    %v213 = vpop.f32.mrb[0].mxu0
    %v214 = vadd.f32 0.0, %v213
    %v215 = vpop.f32.mrb[0].mxu0
    %v216 = vpop.f32.mrb[0].mxu0
    %v217 = vadd.f32 0.0, %v216
    %v218 = vpop.f32.mrb[0].mxu0
    %219 = vdwg.mxu0
    %v220 = vld [vmem:[%s2] sm:$0xff]
    %v221 = vld [vmem:[%s2 + $0x8] sm:$0xff]
    %v222 = vld [vmem:[%s2 + $0x10] sm:$0xff]
    %v223 = vld [vmem:[%s2 + $0x18] sm:$0xff]
    %v224 = vld [vmem:[%s3] sm:$0xff]
    %v225 = vld [vmem:[%s3 + $0x8] sm:$0xff]
    %v226 = vld [vmem:[%s3 + $0x10] sm:$0xff]
    %v227 = vld [vmem:[%s3 + $0x18] sm:$0xff]
    %s228 = sld [smem:[#allocation2]]
    %s229 = sld [smem:[#allocation2 + $0x1]]
    %231 = vset.pattern.permute.xlu0 0
    %232 = vperm.xlu0 %231, %v220
    %v233 = vpop.permute.xlu0 %232
    %236 = vset.pattern.permute.xlu0 0
    %237 = vperm.xlu0 %236, %v221
    %v238 = vpop.permute.xlu0 %237
    %241 = vset.pattern.permute.xlu0 0
    %242 = vperm.xlu0 %241, %v222
    %v243 = vpop.permute.xlu0 %242
    %246 = vset.pattern.permute.xlu0 0
    %247 = vperm.xlu0 %246, %v223
    %v248 = vpop.permute.xlu0 %247
    %v250 = vadd.f32 %v158, %v233
    %v251 = vadd.f32 %v161, %v238
    %v252 = vadd.f32 %v166, %v243
    %v253 = vadd.f32 %v169, %v248
    %v254 = vmul.f32 %v250, %v250
    %v255 = vmul.f32 %v251, %v251
    %v256 = vmul.f32 %v252, %v252
    %v257 = vmul.f32 %v253, %v253
    %v258 = vmul.f32 %v250, %v254
    %v259 = vmul.f32 %v251, %v255
    %v260 = vmul.f32 %v252, %v256
    %v261 = vmul.f32 %v253, %v257
    %v262 = vmul.f32 %v258, 0.044715
    %v263 = vmul.f32 %v259, 0.044715
    %v264 = vmul.f32 %v260, 0.044715
    %v265 = vmul.f32 %v261, 0.044715
    %v266 = vadd.f32 %v250, %v262
    %v267 = vadd.f32 %v251, %v263
    %v268 = vadd.f32 %v252, %v264
    %v269 = vadd.f32 %v253, %v265
    %v270 = vmul.f32 %v266, 0.7978846
    %v271 = vmul.f32 %v267, 0.7978846
    %v272 = vmul.f32 %v268, 0.7978846
    %v273 = vmul.f32 %v269, 0.7978846
    %v274 = vtanh.pop %v270
    %v275 = vtanh.pop %v271
    %v276 = vtanh.pop %v272
    %v277 = vtanh.pop %v273
    %v278 = vadd.f32 %v274, 1.0
    %v279 = vadd.f32 %v275, 1.0
    %v280 = vadd.f32 %v276, 1.0
    %v281 = vadd.f32 %v277, 1.0
    %v282 = vmul.f32 %v278, 0.5
    %v283 = vmul.f32 %v279, 0.5
    %v284 = vmul.f32 %v280, 0.5
    %v285 = vmul.f32 %v281, 0.5
    %v286 = vmul.f32 %v250, %v282
    %v287 = vmul.f32 %v251, %v283
    %v288 = vmul.f32 %v252, %v284
    %v289 = vmul.f32 %v253, %v285
    %vm290 = vcmask 261120
    %v291 = vsel %vm290, %v286, 0.0
    %v292 = vsel %vm290, %v287, 0.0
    %v293 = vadd.f32 %v291, %v292
    %v294 = vsel %vm290, %v288, 0.0
    %v295 = vadd.f32 %v293, %v294
    %v296 = vsel %vm290, %v289, 0.0
    %v297 = vadd.f32 %v295, %v296
    %v298 = vrot.slane %v297, 4
    %v299 = vadd.f32 %v297, %v298
    %v300 = vrot.slane %v299, 2
    %v301 = vadd.f32 %v299, %v300
    %v302 = vrot.slane %v301, 1
    %v303 = vadd.f32 %v301, %v302
    %v304 = vmul.f32 %v286, %v286
    %v305 = vmul.f32 %v287, %v287
    %v306 = vmul.f32 %v288, %v288
    %v307 = vmul.f32 %v289, %v289
    %v308 = vsel %vm290, %v304, 0.0
    %v309 = vsel %vm290, %v305, 0.0
    %v310 = vadd.f32 %v308, %v309
    %v311 = vsel %vm290, %v306, 0.0
    %v312 = vadd.f32 %v310, %v311
    %v313 = vsel %vm290, %v307, 0.0
    %v314 = vadd.f32 %v312, %v313
    %v315 = vrot.slane %v314, 4
    %v316 = vadd.f32 %v314, %v315
    %v317 = vrot.slane %v316, 2
    %v318 = vadd.f32 %v316, %v317
    %v319 = vrot.slane %v318, 1
    %v320 = vadd.f32 %v318, %v319
    %322 = vset.pattern.permute.xlu0 0
    %323 = vperm.xlu0 %322, %v224
    %v324 = vpop.permute.xlu0 %323
    %327 = vset.pattern.permute.xlu0 0
    %328 = vperm.xlu0 %327, %v225
    %v329 = vpop.permute.xlu0 %328
    %332 = vset.pattern.permute.xlu0 0
    %333 = vperm.xlu0 %332, %v226
    %v334 = vpop.permute.xlu0 %333
    %337 = vset.pattern.permute.xlu0 0
    %338 = vperm.xlu0 %337, %v227
    %v339 = vpop.permute.xlu0 %338
    %v341 = vmul.f32 %v286, %v324
    %v342 = vmul.f32 %v287, %v329
    %v343 = vmul.f32 %v288, %v334
    %v344 = vmul.f32 %v289, %v339
    %v345 = vsel %vm290, %v341, 0.0
    %v346 = vsel %vm290, %v342, 0.0
    %v347 = vadd.f32 %v345, %v346
    %v348 = vsel %vm290, %v343, 0.0
    %v349 = vadd.f32 %v347, %v348
    %v350 = vsel %vm290, %v344, 0.0
    %v351 = vadd.f32 %v349, %v350
    %v352 = vrot.slane %v351, 4
    %v353 = vadd.f32 %v351, %v352
    %v354 = vrot.slane %v353, 2
    %v355 = vadd.f32 %v353, %v354
    %v356 = vrot.slane %v355, 1
    %v357 = vadd.f32 %v355, %v356
    %v358 = vmul.f32 %v303, 0.03125
    %v359 = vmul.f32 %v320, 0.03125
    %v360 = vmul.f32 %v358, %v358
    %v361 = vsub.f32 %v359, %v360
    %v362 = vadd.f32 %v361, 1e-05
    %v363 = vrsqrt.pop %v362
    %v364 = vstv %s228
    %v365 = vmul.f32 %v358, %v364
    %v366 = vsub.f32 %v357, %v365
    %v367 = vmul.f32 %v363, %v366
    %v368 = vstv %s229
    %v369 = vadd.f32 %v367, %v368
    %vm370 = vcmask 253952
    %371 = vst.msk [vmem:[%s5] sm:$0x1] %vm370, %v369
    %v372 = vadd.f32 %v174, %v233
    %v373 = vadd.f32 %v177, %v238
    %v374 = vadd.f32 %v182, %v243
    %v375 = vadd.f32 %v185, %v248
    %v376 = vmul.f32 %v372, %v372
    %v377 = vmul.f32 %v373, %v373
    %v378 = vmul.f32 %v374, %v374
    %v379 = vmul.f32 %v375, %v375
    %v380 = vmul.f32 %v372, %v376
    %v381 = vmul.f32 %v373, %v377
    %v382 = vmul.f32 %v374, %v378
    %v383 = vmul.f32 %v375, %v379
    %v384 = vmul.f32 %v380, 0.044715
    %v385 = vmul.f32 %v381, 0.044715
    %v386 = vmul.f32 %v382, 0.044715
    %v387 = vmul.f32 %v383, 0.044715
    %v388 = vadd.f32 %v372, %v384
    %v389 = vadd.f32 %v373, %v385
    %v390 = vadd.f32 %v374, %v386
    %v391 = vadd.f32 %v375, %v387
    %v392 = vmul.f32 %v388, 0.7978846
    %v393 = vmul.f32 %v389, 0.7978846
    %v394 = vmul.f32 %v390, 0.7978846
    %v395 = vmul.f32 %v391, 0.7978846
    %v396 = vtanh.pop %v392
    %v397 = vtanh.pop %v393
    %v398 = vtanh.pop %v394
    %v399 = vtanh.pop %v395
    %v400 = vadd.f32 %v396, 1.0
    %v401 = vadd.f32 %v397, 1.0
    %v402 = vadd.f32 %v398, 1.0
    %v403 = vadd.f32 %v399, 1.0
    %v404 = vmul.f32 %v400, 0.5
    %v405 = vmul.f32 %v401, 0.5
    %v406 = vmul.f32 %v402, 0.5
    %v407 = vmul.f32 %v403, 0.5
    %v408 = vmul.f32 %v372, %v404
    %v409 = vmul.f32 %v373, %v405
    %v410 = vmul.f32 %v374, %v406
    %v411 = vmul.f32 %v375, %v407
    %v412 = vsel %vm290, %v408, 0.0
    %v413 = vsel %vm290, %v409, 0.0
    %v414 = vadd.f32 %v412, %v413
    %v415 = vsel %vm290, %v410, 0.0
    %v416 = vadd.f32 %v414, %v415
    %v417 = vsel %vm290, %v411, 0.0
    %v418 = vadd.f32 %v416, %v417
    %v419 = vrot.slane %v418, 4
    %v420 = vadd.f32 %v418, %v419
    %v421 = vrot.slane %v420, 2
    %v422 = vadd.f32 %v420, %v421
    %v423 = vrot.slane %v422, 1
    %v424 = vadd.f32 %v422, %v423
    %v425 = vmul.f32 %v408, %v408
    %v426 = vmul.f32 %v409, %v409
    %v427 = vmul.f32 %v410, %v410
    %v428 = vmul.f32 %v411, %v411
    %v429 = vsel %vm290, %v425, 0.0
    %v430 = vsel %vm290, %v426, 0.0
    %v431 = vadd.f32 %v429, %v430
    %v432 = vsel %vm290, %v427, 0.0
    %v433 = vadd.f32 %v431, %v432
    %v434 = vsel %vm290, %v428, 0.0
    %v435 = vadd.f32 %v433, %v434
    %v436 = vrot.slane %v435, 4
    %v437 = vadd.f32 %v435, %v436
    %v438 = vrot.slane %v437, 2
    %v439 = vadd.f32 %v437, %v438
    %v440 = vrot.slane %v439, 1
    %v441 = vadd.f32 %v439, %v440
    %v442 = vmul.f32 %v408, %v324
    %v443 = vmul.f32 %v409, %v329
    %v444 = vmul.f32 %v410, %v334
    %v445 = vmul.f32 %v411, %v339
    %v446 = vsel %vm290, %v442, 0.0
    %v447 = vsel %vm290, %v443, 0.0
    %v448 = vadd.f32 %v446, %v447
    %v449 = vsel %vm290, %v444, 0.0
    %v450 = vadd.f32 %v448, %v449
    %v451 = vsel %vm290, %v445, 0.0
    %v452 = vadd.f32 %v450, %v451
    %v453 = vrot.slane %v452, 4
    %v454 = vadd.f32 %v452, %v453
    %v455 = vrot.slane %v454, 2
    %v456 = vadd.f32 %v454, %v455
    %v457 = vrot.slane %v456, 1
    %v458 = vadd.f32 %v456, %v457
    %v459 = vmul.f32 %v424, 0.03125
    %v460 = vmul.f32 %v441, 0.03125
    %v461 = vmul.f32 %v459, %v459
    %v462 = vsub.f32 %v460, %v461
    %v463 = vadd.f32 %v462, 1e-05
    %v464 = vrsqrt.pop %v463
    %v465 = vmul.f32 %v459, %v364
    %v466 = vsub.f32 %v458, %v465
    %v467 = vmul.f32 %v464, %v466
    %v468 = vadd.f32 %v467, %v368
    %469 = vst.msk [vmem:[%s5 + $0x1] sm:$0x1] %vm370, %v468
    %v470 = vadd.f32 %v190, %v233
    %v471 = vadd.f32 %v193, %v238
    %v472 = vadd.f32 %v198, %v243
    %v473 = vadd.f32 %v201, %v248
    %v474 = vmul.f32 %v470, %v470
    %v475 = vmul.f32 %v471, %v471
    %v476 = vmul.f32 %v472, %v472
    %v477 = vmul.f32 %v473, %v473
    %v478 = vmul.f32 %v470, %v474
    %v479 = vmul.f32 %v471, %v475
    %v480 = vmul.f32 %v472, %v476
    %v481 = vmul.f32 %v473, %v477
    %v482 = vmul.f32 %v478, 0.044715
    %v483 = vmul.f32 %v479, 0.044715
    %v484 = vmul.f32 %v480, 0.044715
    %v485 = vmul.f32 %v481, 0.044715
    %v486 = vadd.f32 %v470, %v482
    %v487 = vadd.f32 %v471, %v483
    %v488 = vadd.f32 %v472, %v484
    %v489 = vadd.f32 %v473, %v485
    %v490 = vmul.f32 %v486, 0.7978846
    %v491 = vmul.f32 %v487, 0.7978846
    %v492 = vmul.f32 %v488, 0.7978846
    %v493 = vmul.f32 %v489, 0.7978846
    %v494 = vtanh.pop %v490
    %v495 = vtanh.pop %v491
    %v496 = vtanh.pop %v492
    %v497 = vtanh.pop %v493
    %v498 = vadd.f32 %v494, 1.0
    %v499 = vadd.f32 %v495, 1.0
    %v500 = vadd.f32 %v496, 1.0
    %v501 = vadd.f32 %v497, 1.0
    %v502 = vmul.f32 %v498, 0.5
    %v503 = vmul.f32 %v499, 0.5
    %v504 = vmul.f32 %v500, 0.5
    %v505 = vmul.f32 %v501, 0.5
    %v506 = vmul.f32 %v470, %v502
    %v507 = vmul.f32 %v471, %v503
    %v508 = vmul.f32 %v472, %v504
    %v509 = vmul.f32 %v473, %v505
    %v510 = vsel %vm290, %v506, 0.0
    %v511 = vsel %vm290, %v507, 0.0
    %v512 = vadd.f32 %v510, %v511
    %v513 = vsel %vm290, %v508, 0.0
    %v514 = vadd.f32 %v512, %v513
    %v515 = vsel %vm290, %v509, 0.0
    %v516 = vadd.f32 %v514, %v515
    %v517 = vrot.slane %v516, 4
    %v518 = vadd.f32 %v516, %v517
    %v519 = vrot.slane %v518, 2
    %v520 = vadd.f32 %v518, %v519
    %v521 = vrot.slane %v520, 1
    %v522 = vadd.f32 %v520, %v521
    %v523 = vmul.f32 %v506, %v506
    %v524 = vmul.f32 %v507, %v507
    %v525 = vmul.f32 %v508, %v508
    %v526 = vmul.f32 %v509, %v509
    %v527 = vsel %vm290, %v523, 0.0
    %v528 = vsel %vm290, %v524, 0.0
    %v529 = vadd.f32 %v527, %v528
    %v530 = vsel %vm290, %v525, 0.0
    %v531 = vadd.f32 %v529, %v530
    %v532 = vsel %vm290, %v526, 0.0
    %v533 = vadd.f32 %v531, %v532
    %v534 = vrot.slane %v533, 4
    %v535 = vadd.f32 %v533, %v534
    %v536 = vrot.slane %v535, 2
    %v537 = vadd.f32 %v535, %v536
    %v538 = vrot.slane %v537, 1
    %v539 = vadd.f32 %v537, %v538
    %v540 = vmul.f32 %v506, %v324
    %v541 = vmul.f32 %v507, %v329
    %v542 = vmul.f32 %v508, %v334
    %v543 = vmul.f32 %v509, %v339
    %v544 = vsel %vm290, %v540, 0.0
    %v545 = vsel %vm290, %v541, 0.0
    %v546 = vadd.f32 %v544, %v545
    %v547 = vsel %vm290, %v542, 0.0
    %v548 = vadd.f32 %v546, %v547
    %v549 = vsel %vm290, %v543, 0.0
    %v550 = vadd.f32 %v548, %v549
    %v551 = vrot.slane %v550, 4
    %v552 = vadd.f32 %v550, %v551
    %v553 = vrot.slane %v552, 2
    %v554 = vadd.f32 %v552, %v553
    %v555 = vrot.slane %v554, 1
    %v556 = vadd.f32 %v554, %v555
    %v557 = vmul.f32 %v522, 0.03125
    %v558 = vmul.f32 %v539, 0.03125
    %v559 = vmul.f32 %v557, %v557
    %v560 = vsub.f32 %v558, %v559
    %v561 = vadd.f32 %v560, 1e-05
    %v562 = vrsqrt.pop %v561
    %v563 = vmul.f32 %v557, %v364
    %v564 = vsub.f32 %v556, %v563
    %v565 = vmul.f32 %v562, %v564
    %v566 = vadd.f32 %v565, %v368
    %567 = vst.msk [vmem:[%s5 + $0x2] sm:$0x1] %vm370, %v566
    %v568 = vadd.f32 %v206, %v233
    %v569 = vadd.f32 %v209, %v238
    %v570 = vadd.f32 %v214, %v243
    %v571 = vadd.f32 %v217, %v248
    %v572 = vmul.f32 %v568, %v568
    %v573 = vmul.f32 %v569, %v569
    %v574 = vmul.f32 %v570, %v570
    %v575 = vmul.f32 %v571, %v571
    %v576 = vmul.f32 %v568, %v572
    %v577 = vmul.f32 %v569, %v573
    %v578 = vmul.f32 %v570, %v574
    %v579 = vmul.f32 %v571, %v575
    %v580 = vmul.f32 %v576, 0.044715
    %v581 = vmul.f32 %v577, 0.044715
    %v582 = vmul.f32 %v578, 0.044715
    %v583 = vmul.f32 %v579, 0.044715
    %v584 = vadd.f32 %v568, %v580
    %v585 = vadd.f32 %v569, %v581
    %v586 = vadd.f32 %v570, %v582
    %v587 = vadd.f32 %v571, %v583
    %v588 = vmul.f32 %v584, 0.7978846
    %v589 = vmul.f32 %v585, 0.7978846
    %v590 = vmul.f32 %v586, 0.7978846
    %v591 = vmul.f32 %v587, 0.7978846
    %v592 = vtanh.pop %v588
    %v593 = vtanh.pop %v589
    %v594 = vtanh.pop %v590
    %v595 = vtanh.pop %v591
    %v596 = vadd.f32 %v592, 1.0
    %v597 = vadd.f32 %v593, 1.0
    %v598 = vadd.f32 %v594, 1.0
    %v599 = vadd.f32 %v595, 1.0
    %v600 = vmul.f32 %v596, 0.5
    %v601 = vmul.f32 %v597, 0.5
    %v602 = vmul.f32 %v598, 0.5
    %v603 = vmul.f32 %v599, 0.5
    %v604 = vmul.f32 %v568, %v600
    %v605 = vmul.f32 %v569, %v601
    %v606 = vmul.f32 %v570, %v602
    %v607 = vmul.f32 %v571, %v603
    %v608 = vsel %vm290, %v604, 0.0
    %v609 = vsel %vm290, %v605, 0.0
    %v610 = vadd.f32 %v608, %v609
    %v611 = vsel %vm290, %v606, 0.0
    %v612 = vadd.f32 %v610, %v611
    %v613 = vsel %vm290, %v607, 0.0
    %v614 = vadd.f32 %v612, %v613
    %v615 = vrot.slane %v614, 4
    %v616 = vadd.f32 %v614, %v615
    %v617 = vrot.slane %v616, 2
    %v618 = vadd.f32 %v616, %v617
    %v619 = vrot.slane %v618, 1
    %v620 = vadd.f32 %v618, %v619
    %v621 = vmul.f32 %v604, %v604
    %v622 = vmul.f32 %v605, %v605
    %v623 = vmul.f32 %v606, %v606
    %v624 = vmul.f32 %v607, %v607
    %v625 = vsel %vm290, %v621, 0.0
    %v626 = vsel %vm290, %v622, 0.0
    %v627 = vadd.f32 %v625, %v626
    %v628 = vsel %vm290, %v623, 0.0
    %v629 = vadd.f32 %v627, %v628
    %v630 = vsel %vm290, %v624, 0.0
    %v631 = vadd.f32 %v629, %v630
    %v632 = vrot.slane %v631, 4
    %v633 = vadd.f32 %v631, %v632
    %v634 = vrot.slane %v633, 2
    %v635 = vadd.f32 %v633, %v634
    %v636 = vrot.slane %v635, 1
    %v637 = vadd.f32 %v635, %v636
    %v638 = vmul.f32 %v604, %v324
    %v639 = vmul.f32 %v605, %v329
    %v640 = vmul.f32 %v606, %v334
    %v641 = vmul.f32 %v607, %v339
    %v642 = vsel %vm290, %v638, 0.0
    %v643 = vsel %vm290, %v639, 0.0
    %v644 = vadd.f32 %v642, %v643
    %v645 = vsel %vm290, %v640, 0.0
    %v646 = vadd.f32 %v644, %v645
    %v647 = vsel %vm290, %v641, 0.0
    %v648 = vadd.f32 %v646, %v647
    %v649 = vrot.slane %v648, 4
    %v650 = vadd.f32 %v648, %v649
    %v651 = vrot.slane %v650, 2
    %v652 = vadd.f32 %v650, %v651
    %v653 = vrot.slane %v652, 1
    %v654 = vadd.f32 %v652, %v653
    %v655 = vmul.f32 %v620, 0.03125
    %v656 = vmul.f32 %v637, 0.03125
    %v657 = vmul.f32 %v655, %v655
    %v658 = vsub.f32 %v656, %v657
    %v659 = vadd.f32 %v658, 1e-05
    %v660 = vrsqrt.pop %v659
    %v661 = vmul.f32 %v655, %v364
    %v662 = vsub.f32 %v654, %v661
    %v663 = vmul.f32 %v660, %v662
    %v664 = vadd.f32 %v663, %v368
    %665 = vst.msk [vmem:[%s5 + $0x3] sm:$0x1] %vm370, %v664
    // Predicated region
    $region26: #{distance_head_forward.1} parent=1 // pred_check
      _
    $region27: #{distance_head_forward.1} parent=1 // pred_check_branch
      %667 = sbr.rel (0) target = $region29
    $region28: #{distance_head_forward.1} parent=1 // pred_region
      _
    $region29: #{distance_head_forward.1} parent=1 // pred_fallthru
      _
    // Predicated region
    $region30: #{distance_head_forward.1} parent=1 // pred_check
      _
    $region31: #{distance_head_forward.1} parent=1 // pred_check_branch
      %669 = sbr.rel (0) target = $region33
    $region32: #{distance_head_forward.1} parent=1 // pred_region
      _
    $region33: #{distance_head_forward.1} parent=1 // pred_fallthru
      _
    %670 = vsyncpa [#allocation3], 1

</llo_original>
